<compile_context>
chip_gen: v7x
topology: tpu7x:2x2x1
jax: 0.10.0
libtpu: 0.0.40
codegen_flags: <defaults>
</compile_context>

<pallas_src>
import jax
import jax.numpy as jnp
from jax.experimental import pallas as pl
from jax.experimental.pallas import tpu as pltpu

_LANES = 512                       # lane-dense column width (multiple of 128)
_MAX_ROW_TILE = 2048               # 2048*512*4B = 4 MiB per f32 buffer
_NEG_SLOPE = 0.01                  # nn.LeakyReLU() default
_SMALL_INPUT_THRESHOLD = 1 << 18   # below ~262K elements: skip Pallas entirely
_VMEM_LIMIT_BYTES = 40 * 1024 * 1024  # fits v7x 64 MiB physical with headroom,
                                      # well under v5e/v6e 128 MiB physical


def _round_up(n, m):
    return ((n + m - 1) // m) * m


def _sublane(dtype):
    # Native packed second-minor tile: 8 for 4-byte, 16 for 2-byte, 32 for 1-byte.
    return {4: 8, 2: 16, 1: 32}.get(jnp.dtype(dtype).itemsize, 8)


def _time_embedding_kernel(wb_ref, x_ref, o_ref):
    # wb_ref: (2,) f32 in SMEM -> [weight, bias]; x_ref/o_ref: (TR, 512) tiles.
    w = wb_ref[0]
    b = wb_ref[1]
    y = x_ref[...].astype(jnp.float32) * w + b
    # LeakyReLU with slope 0.01: max(y, 0.01*y) (exact since slope < 1).
    o_ref[...] = jnp.maximum(y, jnp.float32(_NEG_SLOPE) * y).astype(o_ref.dtype)


def _jnp_forward(x, weight, bias):
    w = weight.reshape(()).astype(jnp.float32)
    b = bias.reshape(()).astype(jnp.float32)
    y = x.astype(jnp.float32) * w + b
    return jnp.maximum(y, jnp.float32(_NEG_SLOPE) * y).astype(x.dtype)


def time_embedding_forward(x, weight, bias, *,
                           small_input_threshold=_SMALL_INPUT_THRESHOLD):
    """x: (..., 1); weight: (1, 1); bias: (1,).  Returns same shape & dtype as x."""
    orig_shape = x.shape
    assert orig_shape[-1] == 1, "Linear(1, 1) expects trailing feature dim of 1"
    dtype = x.dtype
    n = x.size

    # Small-input fast path: realistic TimeEmbedding inputs are tiny; XLA
    # fuses this trivially and pallas_call overhead would dominate.
    if n == 0 or n < small_input_threshold:
        return _jnp_forward(x, weight, bias)

    sublane = _sublane(dtype)
    rows = pl.cdiv(n, _LANES)
    n_padded = rows * _LANES

    x_flat = x.reshape(-1)
    if n_padded > n:
        # Pad only to the next multiple of 512 (never up to a tile multiple).
        x_flat = jnp.pad(x_flat, (0, n_padded - n))
    x2d = x_flat.reshape(rows, _LANES)

    # Tile selection: as large as allowed (amortize ~0.35 µs/step overhead),
    # but always >= 2 grid steps so v7x's two TensorCores both get work.
    row_tile = min(_MAX_ROW_TILE, _round_up(pl.cdiv(rows, 2), sublane))
    if row_tile >= rows:
        row_tile = rows  # single block == full array (always a legal block shape)
    grid = (pl.cdiv(rows, row_tile),)  # ragged last block clipped by Pallas

    wb = jnp.concatenate(
        [weight.reshape(1).astype(jnp.float32), bias.reshape(1).astype(jnp.float32)]
    )

    out2d = pl.pallas_call(
        _time_embedding_kernel,
        out_shape=jax.ShapeDtypeStruct((rows, _LANES), dtype),
        grid=grid,
        in_specs=[
            pl.BlockSpec(memory_space=pltpu.SMEM),               # [w, b] scalars
            pl.BlockSpec((row_tile, _LANES), lambda i: (i, 0)),  # input tile
        ],
        out_specs=pl.BlockSpec((row_tile, _LANES), lambda i: (i, 0)),
        compiler_params=pltpu.CompilerParams(
            dimension_semantics=("parallel",),
            vmem_limit_bytes=_VMEM_LIMIT_BYTES,
        ),
    )(wb, x2d)

    out_flat = out2d.reshape(-1)
    if n_padded > n:
        out_flat = out_flat[:n]
    return out_flat.reshape(orig_shape)


if __name__ == "__main__":
    key = jax.random.PRNGKey(0)
    k_w, k_b, k1, k2, k3, k4 = jax.random.split(key, 6)

    # Params mimicking nn.Linear(1,1) init: U(-1/sqrt(fan_in), 1/sqrt(fan_in)), fan_in=1.
    weight = jax.random.uniform(k_w, (1, 1), jnp.float32, minval=-1.0, maxval=1.0)
    bias = jax.random.uniform(k_b, (1,), jnp.float32, minval=-1.0, maxval=1.0)

    def ref(x):
        y = x.astype(jnp.float32) * weight.reshape(()) + bias.reshape(())
        return jnp.where(y >= 0, y, _NEG_SLOPE * y).astype(x.dtype)

    # 1) Small input consistent with the forward -> jnp fast path.
    x_small = jax.random.normal(k1, (2, 8, 1), dtype=jnp.float32)
    out = jax.block_until_ready(time_embedding_forward(x_small, weight, bias))
    assert out.shape == x_small.shape and out.dtype == x_small.dtype
    assert jnp.allclose(out, ref(x_small), atol=1e-6, rtol=1e-6)

    # 2) Force the Pallas path on a ragged (non-multiple-of-512) input to
    #    validate the pad + partial-last-block clipping behaviour.
    x_ragged = jax.random.normal(k2, (4, 129, 1), dtype=jnp.float32)
    out = jax.block_until_ready(
        time_embedding_forward(x_ragged, weight, bias, small_input_threshold=0))
    assert out.shape == x_ragged.shape and out.dtype == x_ragged.dtype
    assert jnp.allclose(out, ref(x_ragged), atol=1e-6, rtol=1e-6)

    # 3) Large divisible input -> Pallas path, no pad / no slice, grid >= 2.
    x_big = jax.random.normal(k3, (1024, 512, 1), dtype=jnp.float32)
    out = jax.block_until_ready(time_embedding_forward(x_big, weight, bias))
    assert out.shape == x_big.shape and out.dtype == x_big.dtype
    assert jnp.allclose(out, ref(x_big), atol=1e-6, rtol=1e-6)

    # 4) bf16 input -> exercises dtype-aware sublane tiling (16-row alignment).
    x_bf16 = jax.random.normal(k4, (512, 640, 1), dtype=jnp.float32).astype(jnp.bfloat16)
    out = jax.block_until_ready(time_embedding_forward(x_bf16, weight, bias))
    assert out.shape == x_bf16.shape and out.dtype == x_bf16.dtype
    assert jnp.allclose(out.astype(jnp.float32), ref(x_bf16).astype(jnp.float32),
                        atol=1e-2, rtol=1e-2)

    print("KERNEL_OK")
</pallas_src>

<mosaic_0001>
module attributes {stable_mosaic.version = 11 : i64} {
  func.func @_time_embedding_kernel(%arg0: i32, %arg1: memref<2xf32, #tpu.memory_space<smem>>, %arg2: memref<2x512xf32, #tpu.memory_space<vmem>>, %arg3: memref<2x512xf32, #tpu.memory_space<vmem>>) attributes {dimension_semantics = [#tpu.dimension_semantics<parallel>], iteration_bounds = array<i64: 1>, scalar_prefetch = 0 : i64, scratch_operands = 0 : i64, tpu.core_type = #tpu.core_type<tc>, window_params = [{transform_indices = @transform_0, window_bounds = array<i64: 2>}, {transform_indices = @transform_1, window_bounds = array<i64: 2, 512>}, {transform_indices = @transform_2, window_bounds = array<i64: 2, 512>}]} {
    %c0 = arith.constant 0 : index
    %0 = memref.load %arg1[%c0] : memref<2xf32, #tpu.memory_space<smem>>
    %c1 = arith.constant 1 : index
    %1 = memref.load %arg1[%c1] : memref<2xf32, #tpu.memory_space<smem>>
    %c0_0 = arith.constant 0 : index
    %c0_1 = arith.constant 0 : index
    %2 = vector.load %arg2[%c0_0, %c0_1] : memref<2x512xf32, #tpu.memory_space<vmem>>, vector<2x512xf32>
    %3 = vector.broadcast %0 : f32 to vector<2x512xf32>
    %4 = arith.mulf %2, %3 : vector<2x512xf32>
    %5 = vector.broadcast %1 : f32 to vector<2x512xf32>
    %6 = arith.addf %4, %5 : vector<2x512xf32>
    %cst = arith.constant 0.00999999977 : f32
    %7 = vector.broadcast %cst : f32 to vector<2x512xf32>
    %8 = arith.mulf %7, %6 : vector<2x512xf32>
    %9 = arith.maximumf %6, %8 : vector<2x512xf32>
    %c0_2 = arith.constant 0 : index
    %c0_3 = arith.constant 0 : index
    %10 = vector.load %arg3[%c0_2, %c0_3] : memref<2x512xf32, #tpu.memory_space<vmem>>, vector<2x512xf32>
    tpu.vector_store %arg3[%c0_2, %c0_3], %9 {strides = array<i32>} : memref<2x512xf32, #tpu.memory_space<vmem>>, vector<2x512xf32>,
    return
  }
  func.func @transform_0(%arg0: i32) -> i32 {
    %c0_i32 = arith.constant 0 : i32
    %c0_i32_0 = arith.constant 0 : i32
    return %c0_i32 : i32
  }
  func.func @transform_1(%arg0: i32) -> (i32, i32) {
    %c0_i32 = arith.constant 0 : i32
    %c0_i32_0 = arith.constant 0 : i32
    return %arg0, %c0_i32 : i32, i32
  }
  func.func @transform_2(%arg0: i32) -> (i32, i32) {
    %c0_i32 = arith.constant 0 : i32
    %c0_i32_0 = arith.constant 0 : i32
    return %arg0, %c0_i32 : i32, i32
  }
}

</mosaic_0001>

<llo_original>
// kernel: tpu_custom_call.1
$region0: #{tpu_custom_call.1}
  #allocation0 [shape = 'u32[]', space=smem, size = 0x4, offset = 0x4, fixed_abs, tag = 'smem constant byte address 0x4 - core index']
  #allocation1 [shape = 'u32[144,128]{1,0:T(1,128)}', space=vmem, size = 0x12000, scoped, tag = 'internal scratch']
  %s0 = inlined_call_operand.hbm [shape: f32[2], index: 0, kind: input, shape index: {}]
  %s1 = inlined_call_operand.hbm [shape: f32[2,512], index: 1, kind: input, shape index: {}]
  %s2 = inlined_call_operand.hbm [shape: f32[2,512], index: 2, kind: output, shape index: {}]
  %s3 = sld [smem:[#allocation0]]
  $region26: #{tpu_custom_call.1} parent=0
    _
  %s5 = ssub.s32 1, %s3
  %s6 = scalar_select 0, %s5, %s3
  $region1: #{tpu_custom_call.1} parent=0
    #allocation2 [shape = 'u8[512]{0}', space=smem, size = 0x200, scoped, tag = 'input window, operand 0, single buffered']
    #allocation3 [shape = 's32[1]{0}', space=sflag, size = 0x4, scoped, tag = 'scoped memory for tpu_custom_call.1']
    #allocation4 [shape = 's32[1]{0}', space=sflag, size = 0x4, scoped, tag = 'scoped memory for tpu_custom_call.1']
    #allocation5 [shape = 's32[1]{0}', space=sflag, size = 0x4, scoped, tag = 'scoped memory for tpu_custom_call.1']
    #allocation6 [shape = 'u8[4096]{0}', space=vmem, size = 0x1000, scoped, tag = 'input window, operand 1, single buffered']
    #allocation7 [shape = 'u8[4096]{0}', space=vmem, size = 0x1000, scoped, tag = 'output window, operand 0, single buffered']
    %7 = vsyncpa [#allocation5], 0
    %8 = vsyncpa [#allocation3], 0
    %9 = vsyncpa [#allocation4], 0
    // Predicated region
    $region2: #{tpu_custom_call.1} parent=1 // pred_check
      _
    $region3: #{tpu_custom_call.1} parent=1 // pred_check_branch
      %11 = sbr.rel (0) target = $region5
    $region4: #{tpu_custom_call.1} parent=1 // pred_region
      %s13 = ssub.s32 16, 16
      %14 = vsyncadd [#allocation5], %s13
      %17 = dma.hbm_to_smem %s0, 16, [#allocation2], [#allocation5]
    $region5: #{tpu_custom_call.1} parent=1 // pred_fallthru
      _
    // Predicated region
    $region6: #{tpu_custom_call.1} parent=1 // pred_check
      _
    $region7: #{tpu_custom_call.1} parent=1 // pred_check_branch
      %19 = sbr.rel (0) target = $region9
    $region8: #{tpu_custom_call.1} parent=1 // pred_region
      %s21 = ssub.s32 128, 128
      %22 = vsyncadd [#allocation3], %s21
      %s24 = sshll.u32 [#allocation6], 4
      %s25 = int_to_ptr.vmem [resolvable:$true] %s24
      %27 = dma.hbm_to_vmem [thread:$0]  %s1, 128, %s25, [#allocation3]
    $region9: #{tpu_custom_call.1} parent=1 // pred_fallthru
      _
    // Predicated region
    $region10: #{tpu_custom_call.1} parent=1 // pred_check
      _
    $region11: #{tpu_custom_call.1} parent=1 // pred_check_branch
      %29 = sbr.rel (0) target = $region13
    $region12: #{tpu_custom_call.1} parent=1 // pred_region
      %30 = dma.done [#allocation5], 16
    $region13: #{tpu_custom_call.1} parent=1 // pred_fallthru
      _
    // Predicated region
    $region14: #{tpu_custom_call.1} parent=1 // pred_check
      _
    $region15: #{tpu_custom_call.1} parent=1 // pred_check_branch
      %32 = sbr.rel (0) target = $region17
    $region16: #{tpu_custom_call.1} parent=1 // pred_region
      %33 = dma.done [#allocation3], 128
    $region17: #{tpu_custom_call.1} parent=1 // pred_fallthru
      _
    %34 = sfence
    %s35 = sld [smem:[#allocation2]]
    %s36 = sld [smem:[#allocation2 + $0x1]]
    %v37 = vld [vmem:[#allocation6] sm:$0xff]
    %v38 = vstv %s35
    %v39 = vmul.f32 %v37, %v38
    %v40 = vstv %s36
    %v41 = vadd.f32 %v39, %v40
    %v42 = vmul.f32 %v41, 0.01
    %v43 = vmax.f32 %v41, %v42
    %44 = vst [vmem:[#allocation7] sm:$0xff] %v43
    // Predicated region
    $region18: #{tpu_custom_call.1} parent=1 // pred_check
      _
    $region19: #{tpu_custom_call.1} parent=1 // pred_check_branch
      %46 = sbr.rel (0) target = $region21
    $region20: #{tpu_custom_call.1} parent=1 // pred_region
      %s48 = ssub.s32 128, 128
      %49 = vsyncadd [#allocation4], %s48
      %s51 = sshll.u32 [#allocation7], 4
      %s52 = int_to_ptr.vmem [resolvable:$true] %s51
      %54 = dma.vmem_to_hbm [thread:$0]  %s52, 128, %s2, [#allocation4]
    $region21: #{tpu_custom_call.1} parent=1 // pred_fallthru
      _
    // Predicated region
    $region22: #{tpu_custom_call.1} parent=1 // pred_check
      _
    $region23: #{tpu_custom_call.1} parent=1 // pred_check_branch
      %56 = sbr.rel (0) target = $region25
    $region24: #{tpu_custom_call.1} parent=1 // pred_region
      %57 = dma.done [#allocation4], 128
    $region25: #{tpu_custom_call.1} parent=1 // pred_fallthru
      _
    %58 = vsyncpa [#allocation3], 1
    %59 = vsyncpa [#allocation4], 1
    %60 = vsyncpa [#allocation5], 1

</llo_original>
